<compile_context>
chip_gen: v7x
topology: tpu7x:2x2x1
jax: 0.10.0
libtpu: 0.0.40
codegen_flags: <defaults>
</compile_context>

<pallas_src>
import functools
import math

import jax
import jax.numpy as jnp
from jax import lax
from jax.experimental import pallas as pl
from jax.experimental.pallas import tpu as pltpu


def _fused_cnn_kernel(*args, layers):
    """Fused Conv1d+ReLU stack for one batch element.

    args layout (positional, as passed by pallas_call):
      x_ref                              : (L_buf0, C0) zero-padded input
      w0_ref, b0_ref, w1_ref, b1_ref, ...: per-layer (K*C_in, C_out) weight slab
                                           and (1, C_out) bias
      o_ref                              : (L_out_last, C_out_last) output
      scratch_0 .. scratch_{n-2}         : VMEM buffers holding the zero-padded
                                           input of layers 1..n-1
    `layers` is a tuple of static per-layer geometry:
      (K, stride, pad, l_out, c_in, c_out, l_buf)
    """
    n = len(layers)
    x_ref = args[0]
    w_refs = [args[1 + 2 * i] for i in range(n)]
    b_refs = [args[2 + 2 * i] for i in range(n)]
    o_ref = args[1 + 2 * n]
    scratch = args[2 + 2 * n:]

    cur_ref = x_ref
    for i, (K, s, pad, l_out, c_in, c_out, l_buf) in enumerate(layers):
        # ---- im2col: K shifted views concatenated along lanes -> (l_out, K*c_in)
        if s == 1:
            taps = [cur_ref[k:k + l_out, :] for k in range(K)]
        else:
            # De-interleave into `s` phases (s strided loads total), then every
            # tap is a contiguous slice of one phase.
            n_rows = l_out + (K - 1) // s
            phases = [cur_ref[pl.ds(p, n_rows, s), :] for p in range(s)]
            taps = []
            for k in range(K):
                q, p = divmod(k, s)
                taps.append(phases[p][q:q + l_out, :])
        cols = taps[0] if len(taps) == 1 else jnp.concatenate(taps, axis=-1)

        # ---- one MXU matmul over the K*C_in contraction, f32 accumulation
        acc = jnp.dot(cols, w_refs[i][...], preferred_element_type=jnp.float32)
        h = jnp.maximum(acc + b_refs[i][...].astype(jnp.float32), 0.0)

        if i == n - 1:
            o_ref[...] = h.astype(o_ref.dtype)
        else:
            # Write into the next layer's zero-padded VMEM input buffer.
            nxt = layers[i + 1]
            nxt_pad, nxt_lbuf = nxt[2], nxt[6]
            buf = scratch[i]
            if nxt_pad == 0 and nxt_lbuf == l_out:
                buf[...] = h.astype(buf.dtype)
            else:
                buf[...] = jnp.zeros(buf.shape, buf.dtype)
                buf[nxt_pad:nxt_pad + l_out, :] = h.astype(buf.dtype)
            cur_ref = buf


class Basic1DCNNPallas:
    """JAX/Pallas port of Basic1DCNN (normalization='none', pool='none')."""

    def __init__(self, input_width, input_channels, kernel_sizes, n_channels,
                 groups, strides, paddings, normalization_type='none',
                 hidden_activation='relu', pool_type='none', seed=0,
                 dtype=jnp.float32):
        assert len(kernel_sizes) == len(n_channels) == len(strides) == len(paddings)
        assert all(n_c % groups == 0 for n_c in n_channels)
        assert groups == 1            # TODO(synk): grouped Conv1d not implemented
        assert normalization_type == 'none'  # TODO(synk): BatchNorm1d/LayerNorm not implemented
        assert pool_type == 'none'    # TODO(synk): MaxPool1d not implemented
        assert hidden_activation == 'relu'

        self.input_width = input_width
        self.input_channels = input_channels
        self.dtype = dtype
        self.layers = []   # per-layer dict: geometry + pre-packed params

        key = jax.random.PRNGKey(seed)
        c_in = input_channels
        l_in = input_width
        for c_out, k, s, p in zip(n_channels, kernel_sizes, strides, paddings):
            key, kw, kb = jax.random.split(key, 3)
            # Deterministic init mimicking torch Conv1d default (uniform +-1/sqrt(fan_in)).
            bound = 1.0 / math.sqrt(c_in * k)
            w_oik = jax.random.uniform(kw, (c_out, c_in, k), jnp.float32, -bound, bound)
            b = jax.random.uniform(kb, (c_out,), jnp.float32, -bound, bound)

            l_out = (l_in + 2 * p - k) // s + 1
            # Size of the zero-padded input buffer this layer reads; must cover
            # both the natural padded length and the phase-split access pattern.
            if s == 1:
                need = l_out + k - 1
            else:
                need = (l_out + (k - 1) // s) * s
            l_buf = max(need, l_in + 2 * p)
            if s > 1:
                l_buf = -(-l_buf // s) * s  # round up to a multiple of stride

            # Pre-pack weights once: (C_out, C_in, K) -> (K*C_in, C_out) slab,
            # row index = k*C_in + c, matching the im2col column ordering.
            w_slab = jnp.transpose(w_oik, (2, 1, 0)).reshape(k * c_in, c_out).astype(dtype)
            self.layers.append(dict(
                k=k, stride=s, pad=p, c_in=c_in, c_out=c_out,
                l_in=l_in, l_out=l_out, l_buf=l_buf,
                w=w_slab, b=b.reshape(1, c_out).astype(dtype),
                w_oik=w_oik, b_vec=b))
            c_in, l_in = c_out, l_out
        self.output_shape = (c_in, l_in)

    def __call__(self, x_ncl):
        B = x_ncl.shape[0]
        n = len(self.layers)
        first, last = self.layers[0], self.layers[-1]

        # NCL -> NLC (channels-last) and zero-pad for layer 0 once in JAX glue.
        h = jnp.transpose(x_ncl, (0, 2, 1)).astype(self.dtype)
        pad_lo = first['pad']
        pad_hi = first['l_buf'] - pad_lo - first['l_in']
        h = jnp.pad(h, ((0, 0), (pad_lo, pad_hi), (0, 0)))

        geom = tuple((lyr['k'], lyr['stride'], lyr['pad'], lyr['l_out'],
                      lyr['c_in'], lyr['c_out'], lyr['l_buf'])
                     for lyr in self.layers)
        kernel = functools.partial(_fused_cnn_kernel, layers=geom)

        in_specs = [pl.BlockSpec((None, first['l_buf'], first['c_in']),
                                 lambda b: (b, 0, 0))]
        operands = [h]
        for lyr in self.layers:
            in_specs.append(pl.BlockSpec(lyr['w'].shape, lambda b: (0, 0)))
            in_specs.append(pl.BlockSpec(lyr['b'].shape, lambda b: (0, 0)))
            operands.extend([lyr['w'], lyr['b']])

        out_spec = pl.BlockSpec((None, last['l_out'], last['c_out']),
                                lambda b: (b, 0, 0))
        scratch_shapes = [pltpu.VMEM((lyr['l_buf'], lyr['c_in']), self.dtype)
                          for lyr in self.layers[1:]]

        out_nlc = pl.pallas_call(
            kernel,
            grid=(B,),
            in_specs=in_specs,
            out_specs=out_spec,
            out_shape=jax.ShapeDtypeStruct((B, last['l_out'], last['c_out']),
                                           self.dtype),
            scratch_shapes=scratch_shapes,
            compiler_params=pltpu.CompilerParams(
                dimension_semantics=("parallel",),
                vmem_limit_bytes=32 * 1024 * 1024),
        )(*operands)
        return jnp.transpose(out_nlc, (0, 2, 1))  # back to NCL


def _reference_forward(model, x_ncl):
    """Pure-JAX reference (lax.conv) matching PyTorch Conv1d semantics."""
    h = x_ncl
    for lyr in model.layers:
        h = lax.conv_general_dilated(h, lyr['w_oik'],
                                     window_strides=(lyr['stride'],),
                                     padding=[(lyr['pad'], lyr['pad'])],
                                     dimension_numbers=('NCH', 'OIH', 'NCH'))
        h = jnp.maximum(h + lyr['b_vec'][None, :, None], 0.0)
    return h


if __name__ == "__main__":
    # Small config consistent with the module's constructor signature.
    B, C_in, L = 2, 4, 16
    model = Basic1DCNNPallas(
        input_width=L,
        input_channels=C_in,
        kernel_sizes=[3, 3],
        n_channels=[8, 16],
        groups=1,
        strides=[1, 2],
        paddings=[1, 1],
        normalization_type='none',
        hidden_activation='relu',
        pool_type='none',
        seed=0,
    )

    x = jax.random.normal(jax.random.PRNGKey(0), (B, C_in, L), jnp.float32)

    out = jax.block_until_ready(model(x))
    ref = jax.block_until_ready(_reference_forward(model, x))

    assert out.shape == (B,) + model.output_shape, (out.shape, model.output_shape)
    assert jnp.allclose(out, ref, atol=1e-4, rtol=1e-4), float(jnp.max(jnp.abs(out - ref)))

    print("KERNEL_OK")
</pallas_src>

<mosaic_0001>
module attributes {stable_mosaic.version = 11 : i64} {
  func.func @_fused_cnn_kernel(%arg0: i32, %arg1: memref<1x18x4xf32, #tpu.memory_space<vmem>>, %arg2: memref<12x8xf32, #tpu.memory_space<vmem>>, %arg3: memref<1x8xf32, #tpu.memory_space<vmem>>, %arg4: memref<24x16xf32, #tpu.memory_space<vmem>>, %arg5: memref<1x16xf32, #tpu.memory_space<vmem>>, %arg6: memref<1x8x16xf32, #tpu.memory_space<vmem>>, %arg7: memref<18x8xf32, #tpu.memory_space<vmem>>) attributes {dimension_semantics = [#tpu.dimension_semantics<parallel>], iteration_bounds = array<i64: 2>, scalar_prefetch = 0 : i64, scratch_operands = 1 : i64, tpu.core_type = #tpu.core_type<tc>, window_params = [{transform_indices = @transform_0, window_bounds = array<i64: 1, 18, 4>}, {pipeline_mode = #tpu.pipeline_mode<synchronous>, transform_indices = @transform_1, window_bounds = array<i64: 12, 8>}, {pipeline_mode = #tpu.pipeline_mode<synchronous>, transform_indices = @transform_2, window_bounds = array<i64: 1, 8>}, {pipeline_mode = #tpu.pipeline_mode<synchronous>, transform_indices = @transform_3, window_bounds = array<i64: 24, 16>}, {pipeline_mode = #tpu.pipeline_mode<synchronous>, transform_indices = @transform_4, window_bounds = array<i64: 1, 16>}, {transform_indices = @transform_5, window_bounds = array<i64: 1, 8, 16>}]} {
    %c0 = arith.constant 0 : index
    %c0_0 = arith.constant 0 : index
    %c0_1 = arith.constant 0 : index
    %0 = vector.load %arg1[%c0, %c0_0, %c0_1] : memref<1x18x4xf32, #tpu.memory_space<vmem>>, vector<1x16x4xf32>
    %1 = vector.shape_cast %0 : vector<1x16x4xf32> to vector<16x4xf32>
    %c0_2 = arith.constant 0 : index
    %c1 = arith.constant 1 : index
    %c0_3 = arith.constant 0 : index
    %2 = vector.load %arg1[%c0_2, %c1, %c0_3] : memref<1x18x4xf32, #tpu.memory_space<vmem>>, vector<1x16x4xf32>
    %3 = vector.shape_cast %2 : vector<1x16x4xf32> to vector<16x4xf32>
    %c0_4 = arith.constant 0 : index
    %c2 = arith.constant 2 : index
    %c0_5 = arith.constant 0 : index
    %4 = vector.load %arg1[%c0_4, %c2, %c0_5] : memref<1x18x4xf32, #tpu.memory_space<vmem>>, vector<1x16x4xf32>
    %5 = vector.shape_cast %4 : vector<1x16x4xf32> to vector<16x4xf32>
    %6 = tpu.concatenate %1, %3, %5 in 1 : vector<16x4xf32>, vector<16x4xf32>, vector<16x4xf32> -> vector<16x12xf32>
    %c0_6 = arith.constant 0 : index
    %c0_7 = arith.constant 0 : index
    %7 = vector.load %arg2[%c0_6, %c0_7] : memref<12x8xf32, #tpu.memory_space<vmem>>, vector<12x8xf32>
    %cst = arith.constant dense<0.000000e+00> : vector<16x8xf32>
    %8 = tpu.matmul %6, %7, %cst {dimension_numbers = #tpu.dot_dimension_numbers<[1], [0], [0], [1], [0, 0, 1, 1], [], []>} : vector<16x12xf32>, vector<12x8xf32>, vector<16x8xf32> -> vector<16x8xf32>
    %c0_8 = arith.constant 0 : index
    %c0_9 = arith.constant 0 : index
    %9 = vector.load %arg3[%c0_8, %c0_9] : memref<1x8xf32, #tpu.memory_space<vmem>>, vector<1x8xf32>
    %10 = vector.broadcast %9 : vector<1x8xf32> to vector<16x8xf32>
    %11 = arith.addf %8, %10 : vector<16x8xf32>
    %cst_10 = arith.constant 0.000000e+00 : f32
    %12 = vector.broadcast %cst_10 : f32 to vector<16x8xf32>
    %13 = arith.maximumf %11, %12 : vector<16x8xf32>
    %cst_11 = arith.constant 0.000000e+00 : f32
    %14 = vector.broadcast %cst_11 : f32 to vector<18x8xf32>
    %c0_12 = arith.constant 0 : index
    %c0_13 = arith.constant 0 : index
    %15 = vector.load %arg7[%c0_12, %c0_13] : memref<18x8xf32, #tpu.memory_space<vmem>>, vector<18x8xf32>
    tpu.vector_store %arg7[%c0_12, %c0_13], %14 {strides = array<i32>} : memref<18x8xf32, #tpu.memory_space<vmem>>, vector<18x8xf32>,
    %c1_14 = arith.constant 1 : index
    %c0_15 = arith.constant 0 : index
    %16 = vector.load %arg7[%c1_14, %c0_15] : memref<18x8xf32, #tpu.memory_space<vmem>>, vector<16x8xf32>
    tpu.vector_store %arg7[%c1_14, %c0_15], %13 {strides = array<i32>} : memref<18x8xf32, #tpu.memory_space<vmem>>, vector<16x8xf32>,
    %c0_16 = arith.constant 0 : index
    %c0_17 = arith.constant 0 : index
    %17 = tpu.strided_load %arg7[%c0_16, %c0_17] {strides = array<i32: 2, 1>} : memref<18x8xf32, #tpu.memory_space<vmem>>, vector<9x8xf32>
    %c1_18 = arith.constant 1 : index
    %c0_19 = arith.constant 0 : index
    %18 = tpu.strided_load %arg7[%c1_18, %c0_19] {strides = array<i32: 2, 1>} : memref<18x8xf32, #tpu.memory_space<vmem>>, vector<9x8xf32>
    %19 = vector.extract_strided_slice %17 {offsets = [0, 0], sizes = [8, 8], strides = [1, 1]} : vector<9x8xf32> to vector<8x8xf32>
    %20 = vector.extract_strided_slice %18 {offsets = [0, 0], sizes = [8, 8], strides = [1, 1]} : vector<9x8xf32> to vector<8x8xf32>
    %21 = vector.extract_strided_slice %17 {offsets = [1, 0], sizes = [8, 8], strides = [1, 1]} : vector<9x8xf32> to vector<8x8xf32>
    %22 = tpu.concatenate %19, %20, %21 in 1 : vector<8x8xf32>, vector<8x8xf32>, vector<8x8xf32> -> vector<8x24xf32>
    %c0_20 = arith.constant 0 : index
    %c0_21 = arith.constant 0 : index
    %23 = vector.load %arg4[%c0_20, %c0_21] : memref<24x16xf32, #tpu.memory_space<vmem>>, vector<24x16xf32>
    %cst_22 = arith.constant dense<0.000000e+00> : vector<8x16xf32>
    %24 = tpu.matmul %22, %23, %cst_22 {dimension_numbers = #tpu.dot_dimension_numbers<[1], [0], [0], [1], [0, 0, 1, 1], [], []>} : vector<8x24xf32>, vector<24x16xf32>, vector<8x16xf32> -> vector<8x16xf32>
    %c0_23 = arith.constant 0 : index
    %c0_24 = arith.constant 0 : index
    %25 = vector.load %arg5[%c0_23, %c0_24] : memref<1x16xf32, #tpu.memory_space<vmem>>, vector<1x16xf32>
    %26 = vector.broadcast %25 : vector<1x16xf32> to vector<8x16xf32>
    %27 = arith.addf %24, %26 : vector<8x16xf32>
    %cst_25 = arith.constant 0.000000e+00 : f32
    %28 = vector.broadcast %cst_25 : f32 to vector<8x16xf32>
    %29 = arith.maximumf %27, %28 : vector<8x16xf32>
    %c0_26 = arith.constant 0 : index
    %c0_27 = arith.constant 0 : index
    %c0_28 = arith.constant 0 : index
    %30 = vector.load %arg6[%c0_26, %c0_27, %c0_28] : memref<1x8x16xf32, #tpu.memory_space<vmem>>, vector<1x8x16xf32>
    %31 = vector.shape_cast %30 : vector<1x8x16xf32> to vector<8x16xf32>
    %32 = vector.shape_cast %29 : vector<8x16xf32> to vector<1x8x16xf32>
    tpu.vector_store %arg6[%c0_26, %c0_27, %c0_28], %32 {strides = array<i32>} : memref<1x8x16xf32, #tpu.memory_space<vmem>>, vector<1x8x16xf32>,
    return
  }
  func.func @transform_0(%arg0: i32) -> (i32, i32, i32) {
    %c0_i32 = arith.constant 0 : i32
    %c0_i32_0 = arith.constant 0 : i32
    %c0_i32_1 = arith.constant 0 : i32
    return %arg0, %c0_i32, %c0_i32_0 : i32, i32, i32
  }
  func.func @transform_1(%arg0: i32) -> (i32, i32) {
    %c0_i32 = arith.constant 0 : i32
    %c0_i32_0 = arith.constant 0 : i32
    %c0_i32_1 = arith.constant 0 : i32
    return %c0_i32, %c0_i32_0 : i32, i32
  }
  func.func @transform_2(%arg0: i32) -> (i32, i32) {
    %c0_i32 = arith.constant 0 : i32
    %c0_i32_0 = arith.constant 0 : i32
    %c0_i32_1 = arith.constant 0 : i32
    return %c0_i32, %c0_i32_0 : i32, i32
  }
  func.func @transform_3(%arg0: i32) -> (i32, i32) {
    %c0_i32 = arith.constant 0 : i32
    %c0_i32_0 = arith.constant 0 : i32
    %c0_i32_1 = arith.constant 0 : i32
    return %c0_i32, %c0_i32_0 : i32, i32
  }
  func.func @transform_4(%arg0: i32) -> (i32, i32) {
    %c0_i32 = arith.constant 0 : i32
    %c0_i32_0 = arith.constant 0 : i32
    %c0_i32_1 = arith.constant 0 : i32
    return %c0_i32, %c0_i32_0 : i32, i32
  }
  func.func @transform_5(%arg0: i32) -> (i32, i32, i32) {
    %c0_i32 = arith.constant 0 : i32
    %c0_i32_0 = arith.constant 0 : i32
    %c0_i32_1 = arith.constant 0 : i32
    return %arg0, %c0_i32, %c0_i32_0 : i32, i32, i32
  }
}

</mosaic_0001>

<llo_original>
// kernel: tpu_custom_call.1
$region0: #{tpu_custom_call.1}
  #allocation0 [shape = 'u32[]', space=smem, size = 0x4, offset = 0x4, fixed_abs, tag = 'smem constant byte address 0x4 - core index']
  #allocation1 [shape = 'u32[144,128]{1,0:T(1,128)}', space=vmem, size = 0x12000, scoped, tag = 'internal scratch']
  #allocation2 [shape = 'f32[18,8]{1,0:T(8,128)}', space=vmem, size = 0x3000, scoped, tag = 'scratch operand']
  %s0 = inlined_call_operand.vmem [shape: f32[2,18,4], index: 0, kind: input, shape index: {}]
  %s1 = inlined_call_operand.vmem [shape: f32[12,8], index: 1, kind: input, shape index: {}]
  %s2 = inlined_call_operand.vmem [shape: f32[1,8], index: 2, kind: input, shape index: {}]
  %s3 = inlined_call_operand.vmem [shape: f32[24,16], index: 3, kind: input, shape index: {}]
  %s4 = inlined_call_operand.vmem [shape: f32[1,16], index: 4, kind: input, shape index: {}]
  %s5 = inlined_call_operand.hbm [shape: f32[2,8,16], index: 5, kind: output, shape index: {}]
  %s6 = sld [smem:[#allocation0]]
  $region53: #{tpu_custom_call.1} parent=0
    _
  %s8 = ssub.s32 1, %s6
  %s9 = scalar_select 0, %s8, %s6
  $region1: #{tpu_custom_call.1} parent=0
    #allocation3 [shape = 'u8[8192]{0}', space=vmem, size = 0x2000, scoped, tag = 'output window, operand 0']
    #allocation4 [shape = 's32[2]{0}', space=sflag, size = 0x8, scoped, tag = 'scoped memory for tpu_custom_call.1']
    %10 = vsyncpa [#allocation4], 0
    %s11 = scalar_lea.sflag [#allocation4], 1
    %12 = vsyncpa %s11, 0
    loop: start=0, step=1, limit=4
    $region2: #{tpu_custom_call.1} parent=1 // loop_pre_header
      _
    $region3: #{tpu_custom_call.1} parent=1 // loop_header
      %s14 = sphi 0, %s18
      %p15 = scmp.ge.s32.totalorder %s14, 4
      %s24 = sphi 0, %s26
      %s27 = sphi 0, %s24
      %s28 = sphi 0, %s27
      %s44 = sphi 0, %s28
      %s48 = sphi 0, %s48
      %s50 = sphi 0, %s48
      %s51 = sphi 0, %s50
      %s65 = sphi 0, %s51
      %s69 = sphi 0, %s69
      %s71 = sphi 0, %s69
      %s72 = sphi 0, %s71
      %s86 = sphi 0, %s72
      %s90 = sphi 0, %s90
      %s92 = sphi 0, %s90
      %s93 = sphi 0, %s92
      %s107 = sphi 0, %s93
      %s111 = sphi 0, %s111
      %s113 = sphi 0, %s111
      %s114 = sphi 0, %s113
      %s128 = sphi 0, %s114
      %s134 = sphi 0, %s136
      %s137 = sphi 0, %s134
      %s138 = sphi 0, %s137
      %s154 = sphi 0, %s138
    $region4: #{tpu_custom_call.1} parent=1 // loop_header_branch
      %17 = sbr.rel (%p15) target = $region8
    $region5: #{tpu_custom_call.1} parent=1 // loop_body
      %s19 = ssub.s32 %s14, 1
      %s20 = ssub.s32 %s14, 2
      %s21 = sadd.s32 %s14, 1
      %s22 = ssub.s32 %s14, %s21
      %p23 = scmp.eq.s32.totalorder %s22, 0
      %s25 = sadd.s32 %s24, 1
      %s26 = scalar_select %p23, %s24, %s25
      %p29 = pneg %p23
      %p30 = scmp.eq.s32.totalorder %s14, 1
      %p31 = por %p29, %p30
      %p32 = scmp.ne.s32.totalorder %s24, %s27
      %p33 = scmp.eq.s32.totalorder %s14, 0
      %p34 = por %p32, %p33
      %p35 = scmp.ne.s32.totalorder %s24, %s27
      %p36 = scmp.eq.s32.totalorder %s19, 1
      %p37 = por %p35, %p36
      %p38 = scmp.ne.s32.totalorder %s27, %s28
      %p39 = scmp.eq.s32.totalorder %s19, 0
      %p40 = por %p38, %p39
      %p41 = scmp.ne.s32.totalorder %s27, %s28
      %p42 = scmp.eq.s32.totalorder %s20, 1
      %p43 = por %p41, %p42
      %p45 = scmp.ne.s32.totalorder %s28, %s44
      %p46 = scmp.eq.s32.totalorder %s20, 0
      %p47 = por %p45, %p46
      %s49 = sadd.s32 %s48, 1
      %p52 = scmp.eq.s32.totalorder %s14, 1
      %p53 = scmp.ne.s32.totalorder %s48, %s50
      %p54 = scmp.eq.s32.totalorder %s14, 0
      %p55 = por %p53, %p54
      %p56 = scmp.ne.s32.totalorder %s48, %s50
      %p57 = scmp.eq.s32.totalorder %s19, 1
      %p58 = por %p56, %p57
      %p59 = scmp.ne.s32.totalorder %s50, %s51
      %p60 = scmp.eq.s32.totalorder %s19, 0
      %p61 = por %p59, %p60
      %p62 = scmp.ne.s32.totalorder %s50, %s51
      %p63 = scmp.eq.s32.totalorder %s20, 1
      %p64 = por %p62, %p63
      %p66 = scmp.ne.s32.totalorder %s51, %s65
      %p67 = scmp.eq.s32.totalorder %s20, 0
      %p68 = por %p66, %p67
      %s70 = sadd.s32 %s69, 1
      %p73 = scmp.eq.s32.totalorder %s14, 1
      %p74 = scmp.ne.s32.totalorder %s69, %s71
      %p75 = scmp.eq.s32.totalorder %s14, 0
      %p76 = por %p74, %p75
      %p77 = scmp.ne.s32.totalorder %s69, %s71
      %p78 = scmp.eq.s32.totalorder %s19, 1
      %p79 = por %p77, %p78
      %p80 = scmp.ne.s32.totalorder %s71, %s72
      %p81 = scmp.eq.s32.totalorder %s19, 0
      %p82 = por %p80, %p81
      %p83 = scmp.ne.s32.totalorder %s71, %s72
      %p84 = scmp.eq.s32.totalorder %s20, 1
      %p85 = por %p83, %p84
      %p87 = scmp.ne.s32.totalorder %s72, %s86
      %p88 = scmp.eq.s32.totalorder %s20, 0
      %p89 = por %p87, %p88
      %s91 = sadd.s32 %s90, 1
      %p94 = scmp.eq.s32.totalorder %s14, 1
      %p95 = scmp.ne.s32.totalorder %s90, %s92
      %p96 = scmp.eq.s32.totalorder %s14, 0
      %p97 = por %p95, %p96
      %p98 = scmp.ne.s32.totalorder %s90, %s92
      %p99 = scmp.eq.s32.totalorder %s19, 1
      %p100 = por %p98, %p99
      %p101 = scmp.ne.s32.totalorder %s92, %s93
      %p102 = scmp.eq.s32.totalorder %s19, 0
      %p103 = por %p101, %p102
      %p104 = scmp.ne.s32.totalorder %s92, %s93
      %p105 = scmp.eq.s32.totalorder %s20, 1
      %p106 = por %p104, %p105
      %p108 = scmp.ne.s32.totalorder %s93, %s107
      %p109 = scmp.eq.s32.totalorder %s20, 0
      %p110 = por %p108, %p109
      %s112 = sadd.s32 %s111, 1
      %p115 = scmp.eq.s32.totalorder %s14, 1
      %p116 = scmp.ne.s32.totalorder %s111, %s113
      %p117 = scmp.eq.s32.totalorder %s14, 0
      %p118 = por %p116, %p117
      %p119 = scmp.ne.s32.totalorder %s111, %s113
      %p120 = scmp.eq.s32.totalorder %s19, 1
      %p121 = por %p119, %p120
      %p122 = scmp.ne.s32.totalorder %s113, %s114
      %p123 = scmp.eq.s32.totalorder %s19, 0
      %p124 = por %p122, %p123
      %p125 = scmp.ne.s32.totalorder %s113, %s114
      %p126 = scmp.eq.s32.totalorder %s20, 1
      %p127 = por %p125, %p126
      %p129 = scmp.ne.s32.totalorder %s114, %s128
      %p130 = scmp.eq.s32.totalorder %s20, 0
      %p131 = por %p129, %p130
      %s132 = ssub.s32 %s14, %s21
      %p133 = scmp.eq.s32.totalorder %s132, 0
      %s135 = sadd.s32 %s134, 1
      %s136 = scalar_select %p133, %s134, %s135
      %p139 = pneg %p133
      %p140 = scmp.eq.s32.totalorder %s14, 1
      %p141 = por %p139, %p140
      %p142 = scmp.ne.s32.totalorder %s134, %s137
      %p143 = scmp.eq.s32.totalorder %s14, 0
      %p144 = por %p142, %p143
      %p145 = scmp.ne.s32.totalorder %s134, %s137
      %p146 = scmp.eq.s32.totalorder %s19, 1
      %p147 = por %p145, %p146
      %p148 = scmp.ne.s32.totalorder %s137, %s138
      %p149 = scmp.eq.s32.totalorder %s19, 0
      %p150 = por %p148, %p149
      %p151 = scmp.ne.s32.totalorder %s137, %s138
      %p152 = scmp.eq.s32.totalorder %s20, 1
      %p153 = por %p151, %p152
      %p155 = scmp.ne.s32.totalorder %s138, %s154
      %p156 = scmp.eq.s32.totalorder %s20, 0
      %p157 = por %p155, %p156
      %p158 = scmp.le.s32.totalorder 1, %s14
      %p159 = scmp.lt.s32.totalorder %s14, 3
      %p160 = pnand %p158, %p159
      %p161 = pneg %p160
      // Predicated region
      $region9: #{tpu_custom_call.1} parent=5 // pred_check
        _
      $region10: #{tpu_custom_call.1} parent=5 // pred_check_branch
        %163 = sbr.rel (%p160) target = $region12
      $region11: #{tpu_custom_call.1} parent=5 // pred_region
        %s164 = ssub.s32 %s14, 1
        // Predicated region
        $region13: #{tpu_custom_call.1} parent=11 // pred_check
          %p165 = pneg %p61
        $region14: #{tpu_custom_call.1} parent=11 // pred_check_branch
          %167 = sbr.rel (%p165) target = $region16
        $region15: #{tpu_custom_call.1} parent=11 // pred_region
          _
        $region16: #{tpu_custom_call.1} parent=11 // pred_fallthru
          _
        // Predicated region
        $region17: #{tpu_custom_call.1} parent=11 // pred_check
          %p168 = pneg %p82
        $region18: #{tpu_custom_call.1} parent=11 // pred_check_branch
          %170 = sbr.rel (%p168) target = $region20
        $region19: #{tpu_custom_call.1} parent=11 // pred_region
          _
        $region20: #{tpu_custom_call.1} parent=11 // pred_fallthru
          _
        // Predicated region
        $region21: #{tpu_custom_call.1} parent=11 // pred_check
          %p171 = pneg %p103
        $region22: #{tpu_custom_call.1} parent=11 // pred_check_branch
          %173 = sbr.rel (%p171) target = $region24
        $region23: #{tpu_custom_call.1} parent=11 // pred_region
          _
        $region24: #{tpu_custom_call.1} parent=11 // pred_fallthru
          _
        // Predicated region
        $region25: #{tpu_custom_call.1} parent=11 // pred_check
          %p174 = pneg %p124
        $region26: #{tpu_custom_call.1} parent=11 // pred_check_branch
          %176 = sbr.rel (%p174) target = $region28
        $region27: #{tpu_custom_call.1} parent=11 // pred_region
          _
        $region28: #{tpu_custom_call.1} parent=11 // pred_fallthru
          _
      $region12: #{tpu_custom_call.1} parent=5 // pred_fallthru
        _
      %p177 = scmp.lt.s32.totalorder %s14, 2
      // Predicated region
      $region29: #{tpu_custom_call.1} parent=5 // pred_check
        %p178 = pneg %p177
      $region30: #{tpu_custom_call.1} parent=5 // pred_check_branch
        %180 = sbr.rel (%p178) target = $region32
      $region31: #{tpu_custom_call.1} parent=5 // pred_region
        // Predicated region
        $region33: #{tpu_custom_call.1} parent=31 // pred_check
          %p181 = pneg %p34
        $region34: #{tpu_custom_call.1} parent=31 // pred_check_branch
          %183 = sbr.rel (%p181) target = $region36
        $region35: #{tpu_custom_call.1} parent=31 // pred_region
          %p184 = scmp.lt.s32.totalorder %s14, 1
          %s185 = scalar_select %p184, %s14, 1
          %s186 = smul.addr %s185, 3
          %s187 = smul.addr %s186, 8
          %s188 = scalar_lea.vmem %s0, %s187
        $region36: #{tpu_custom_call.1} parent=31 // pred_fallthru
          _
      $region32: #{tpu_custom_call.1} parent=5 // pred_fallthru
        _
      %p189 = scmp.le.s32.totalorder 1, %s14
      %p190 = scmp.lt.s32.totalorder %s14, 3
      %p191 = pnand %p189, %p190
      %p192 = pneg %p191
      // Predicated region
      $region37: #{tpu_custom_call.1} parent=5 // pred_check
        _
      $region38: #{tpu_custom_call.1} parent=5 // pred_check_branch
        %194 = sbr.rel (%p191) target = $region40
      $region39: #{tpu_custom_call.1} parent=5 // pred_region
        %s195 = ssub.s32 %s14, 1
        %p196 = scmp.lt.s32.totalorder %s19, 1
        %s197 = scalar_select %p196, %s19, 1
        %s198 = smul.addr %s197, 3
        %s199 = smul.addr %s198, 8
        %s200 = scalar_lea.vmem %s0, %s199
        %p201 = pneg %p40
        %p202 = pneg %p37
        %p203 = pneg %p61
        %p204 = pneg %p58
        %p205 = pneg %p82
        %p206 = pneg %p79
        %p207 = pneg %p103
        %p208 = pneg %p100
        %p209 = pneg %p124
        %p210 = pneg %p121
        %p211 = pneg %p150
        %p212 = pneg %p147
        %s213 = sand.u32 %s137, 1
        %s214 = scalar_lea.sflag [#allocation4], %s213
        %s215 = sand.u32 %s137, 1
        %s216 = smul.addr %s215, 8
        %s217 = scalar_lea.vmem [#allocation3], %s216
        %p218 = scmp.lt.s32.totalorder %s19, 1
        %s219 = scalar_select %p218, %s19, 1
        %s220 = smul.addr %s219, 3
        %s221 = smul.addr %s220, 8
        %s222 = scalar_lea.vmem %s0, %s221
        %v223 = vld [vmem:[%s222] sm:$0xff]
        %v224 = vld [vmem:[%s222 + $0x8] sm:$0xff]
        %v225 = vld [vmem:[%s222 + $0x1] sm:$0xff]
        %v226 = vld [vmem:[%s222 + $0x9] sm:$0xff]
        %v227 = vld [vmem:[%s222 + $0x2] sm:$0xff]
        %v228 = vld [vmem:[%s222 + $0xa] sm:$0xff]
        %231 = vrot.lane.b32.xlu0 %v225, 4
        %v232 = vpop.permute.xlu0 %231
        %233 = vrot.lane.b32.xlu0 %v226, 4
        %v234 = vpop.permute.xlu0 %233
        %239 = vrot.lane.b32.xlu0 %v227, 8
        %v240 = vpop.permute.xlu0 %239
        %241 = vrot.lane.b32.xlu0 %v228, 8
        %v242 = vpop.permute.xlu0 %241
        %vm245 = vcmask 31744
        %v246 = vsel %vm245, %v223, %v232
        %v247 = vsel %vm245, %v224, %v234
        %vm248 = vcmask 64512
        %v249 = vsel %vm248, %v246, %v240
        %v250 = vsel %vm248, %v247, %v242
        %v251 = vld [vmem:[%s1] sm:$0xff]
        %v252 = vld [vmem:[%s1 + $0x8] sm:$0xf]
        %v253 = vld [vmem:[%s2] sm:$0x1]
        %v255 = vlaneseq
        %v256 = vshrl.u32 %v255, 7
        %v257 = vsub.s32 0, %v256
        %v258 = vrot.slane %v253, %v257
        %vm260 = vcmask 97280
        %v262 = vsel %vm260, %v249, 0
        %v265 = vsel %vm260, %v250, 0
        %vm267 = vcmask 1043456
        %v269 = vsel %vm267, %v252, 0
        %271 = vmatprep.subr.mxu0 0.0
        %272 = vmatpush1.msra.mxu0 %v251
        %273 = vmatprep.subr.mxu0 0.0
        %274 = vmatpush1.msra.mxu0 %v269
        %275 = vmatprep.subr.mxu0 0.0
        %276 = vmatpush1.msra.mxu0 0.0
        %277 = vmatprep.subr.mxu0 0.0
        %278 = vmatpush1.msra.mxu0 0.0
        %279 = vmatprep.subr.mxu0 0.0
        %280 = vmatpush1.msra.mxu0 0.0
        %281 = vmatprep.subr.mxu0 0.0
        %282 = vmatpush1.msra.mxu0 0.0
        %283 = vmatprep.subr.mxu0 0.0
        %284 = vmatpush1.msra.mxu0 0.0
        %285 = vmatprep.subr.mxu0 0.0
        %286 = vmatpush1.msra.mxu0 0.0
        %287 = vmatprep.subr.mxu0 0.0
        %288 = vmatpush1.msra.mxu0 0.0
        %289 = vmatprep.subr.mxu0 0.0
        %290 = vmatpush1.msra.mxu0 0.0
        %291 = vmatprep.subr.mxu0 0.0
        %292 = vmatpush1.msra.mxu0 0.0
        %293 = vmatprep.subr.mxu0 0.0
        %294 = vmatpush1.msra.mxu0 0.0
        %295 = vmatprep.subr.mxu0 0.0
        %296 = vmatpush1.msra.mxu0 0.0
        %297 = vmatprep.subr.mxu0 0.0
        %298 = vmatpush1.msra.mxu0 0.0
        %299 = vmatprep.subr.mxu0 0.0
        %300 = vmatpush1.msra.mxu0 0.0
        %301 = vmatprep.subr.mxu0 0.0
        %302 = vmatpush1.msra.mxu0 0.0
        %303 = vmatprep.subr.mxu0 0.0
        %304 = vmatpush1.msra.mxu0 0.0
        %305 = vmatprep.subr.mxu0 0.0
        %306 = vmatpush1.msra.mxu0 0.0
        %307 = vmatprep.subr.mxu0 0.0
        %308 = vmatpush1.msra.mxu0 0.0
        %309 = vmatprep.subr.mxu0 0.0
        %310 = vmatpush1.msra.mxu0 0.0
        %311 = vmatprep.subr.mxu0 0.0
        %312 = vmatpush1.msra.mxu0 0.0
        %313 = vmatprep.subr.mxu0 0.0
        %314 = vmatpush1.msra.mxu0 0.0
        %315 = vmatprep.subr.mxu0 0.0
        %316 = vmatpush1.msra.mxu0 0.0
        %317 = vmatprep.subr.mxu0 0.0
        %318 = vmatpush1.msra.mxu0 0.0
        %319 = vmatprep.subr.mxu0 0.0
        %320 = vmatpush1.msra.mxu0 0.0
        %321 = vmatprep.subr.mxu0 0.0
        %322 = vmatpush1.msra.mxu0 0.0
        %323 = vmatprep.subr.mxu0 0.0
        %324 = vmatpush1.msra.mxu0 0.0
        %325 = vmatprep.subr.mxu0 0.0
        %326 = vmatpush1.msra.mxu0 0.0
        %327 = vmatprep.subr.mxu0 0.0
        %328 = vmatpush1.msra.mxu0 0.0
        %329 = vmatprep.subr.mxu0 0.0
        %330 = vmatpush1.msra.mxu0 0.0
        %331 = vmatprep.subr.mxu0 0.0
        %332 = vmatpush1.msra.mxu0 0.0
        %333 = vmatprep.subr.mxu0 0.0
        %334 = vmatpush1.msra.mxu0 0.0
        %335 = vmatprep.mubr.f32.mxu0 0.0
        %336 = vmatmul.mubr.f32.gmra.mrb[0].mxu0 %v262
        %v337 = vpop.f32.mrb[0].mxu0
        %v338 = vadd.f32 %v258, %v337
        %v339 = vpop.f32.mrb[0].mxu0
        %340 = vmatprep.mubr.f32.mxu0 0.0
        %341 = vmatmul.mubr.f32.gmra.mrb[0].mxu0 %v265
        %v342 = vpop.f32.mrb[0].mxu0
        %v343 = vadd.f32 %v258, %v342
        %v344 = vpop.f32.mrb[0].mxu0
        %345 = vdwg.mxu0
        %v346 = vmax.f32 %v338, 0.0
        %v347 = vmax.f32 %v343, 0.0
        %348 = vst.msk [vmem:[#allocation2] sm:$0xff] %vm248, 0.0
        %349 = vst.msk [vmem:[#allocation2 + $0x8] sm:$0xff] %vm248, 0.0
        %vm350 = vcmask 58368
        %351 = vst.msk [vmem:[#allocation2 + $0x10] sm:$0x3] %vm350, 0.0
        %352 = vst.msk [vmem:[#allocation2 + $0x1] sm:$0xff] %vm248, %v346
        %353 = vst.msk [vmem:[#allocation2 + $0x9] sm:$0xff] %vm248, %v347
        %v354 = vld [vmem:[#allocation2] ss:$2 sm:$0xff]
        %s355 = scalar_lea.vmem [#allocation2], 16
        %v356 = vld [vmem:[%s355] ss:$2 sm:$0x1]
        %s357 = scalar_lea.vmem [#allocation2], 1
        %v358 = vld [vmem:[%s357] ss:$2 sm:$0xff]
        %360 = vrot.lane.b32.xlu0 %v358, 8
        %v361 = vpop.permute.xlu0 %360
        %vm365 = vcmask 1046528
        %v366 = vrot.slane %v354, 1
        %v367 = vrot.slane %v356, 1
        %v368 = vsel %vm365, %v366, %v367
        %369 = vrot.lane.b32.xlu0 %v368, 16
        %v370 = vpop.permute.xlu0 %369
        %v372 = vsel %vm248, %v354, %v361
        %vm373 = vcmask 130048
        %v374 = vsel %vm373, %v372, %v370
        %v375 = vld [vmem:[%s3] sm:$0xff]
        %v376 = vld [vmem:[%s3 + $0x8] sm:$0xff]
        %v377 = vld [vmem:[%s3 + $0x10] sm:$0xff]
        %v378 = vld [vmem:[%s4] sm:$0x1]
        %v380 = vlaneseq
        %v381 = vshrl.u32 %v380, 7
        %v382 = vsub.s32 0, %v381
        %v383 = vrot.slane %v378, %v382
        %vm385 = vcmask 195584
        %v387 = vsel %vm385, %v374, 0
        %389 = vmatprep.subr.mxu0 0.0
        %390 = vmatpush1.msra.mxu0 %v375
        %391 = vmatprep.subr.mxu0 0.0
        %392 = vmatpush1.msra.mxu0 %v376
        %393 = vmatprep.subr.mxu0 0.0
        %394 = vmatpush1.msra.mxu0 %v377
        %395 = vmatprep.subr.mxu0 0.0
        %396 = vmatpush1.msra.mxu0 0.0
        %397 = vmatprep.subr.mxu0 0.0
        %398 = vmatpush1.msra.mxu0 0.0
        %399 = vmatprep.subr.mxu0 0.0
        %400 = vmatpush1.msra.mxu0 0.0
        %401 = vmatprep.subr.mxu0 0.0
        %402 = vmatpush1.msra.mxu0 0.0
        %403 = vmatprep.subr.mxu0 0.0
        %404 = vmatpush1.msra.mxu0 0.0
        %405 = vmatprep.subr.mxu0 0.0
        %406 = vmatpush1.msra.mxu0 0.0
        %407 = vmatprep.subr.mxu0 0.0
        %408 = vmatpush1.msra.mxu0 0.0
        %409 = vmatprep.subr.mxu0 0.0
        %410 = vmatpush1.msra.mxu0 0.0
        %411 = vmatprep.subr.mxu0 0.0
        %412 = vmatpush1.msra.mxu0 0.0
        %413 = vmatprep.subr.mxu0 0.0
        %414 = vmatpush1.msra.mxu0 0.0
        %415 = vmatprep.subr.mxu0 0.0
        %416 = vmatpush1.msra.mxu0 0.0
        %417 = vmatprep.subr.mxu0 0.0
        %418 = vmatpush1.msra.mxu0 0.0
        %419 = vmatprep.subr.mxu0 0.0
        %420 = vmatpush1.msra.mxu0 0.0
        %421 = vmatprep.subr.mxu0 0.0
        %422 = vmatpush1.msra.mxu0 0.0
        %423 = vmatprep.subr.mxu0 0.0
        %424 = vmatpush1.msra.mxu0 0.0
        %425 = vmatprep.subr.mxu0 0.0
        %426 = vmatpush1.msra.mxu0 0.0
        %427 = vmatprep.subr.mxu0 0.0
        %428 = vmatpush1.msra.mxu0 0.0
        %429 = vmatprep.subr.mxu0 0.0
        %430 = vmatpush1.msra.mxu0 0.0
        %431 = vmatprep.subr.mxu0 0.0
        %432 = vmatpush1.msra.mxu0 0.0
        %433 = vmatprep.subr.mxu0 0.0
        %434 = vmatpush1.msra.mxu0 0.0
        %435 = vmatprep.subr.mxu0 0.0
        %436 = vmatpush1.msra.mxu0 0.0
        %437 = vmatprep.subr.mxu0 0.0
        %438 = vmatpush1.msra.mxu0 0.0
        %439 = vmatprep.subr.mxu0 0.0
        %440 = vmatpush1.msra.mxu0 0.0
        %441 = vmatprep.subr.mxu0 0.0
        %442 = vmatpush1.msra.mxu0 0.0
        %443 = vmatprep.subr.mxu0 0.0
        %444 = vmatpush1.msra.mxu0 0.0
        %445 = vmatprep.subr.mxu0 0.0
        %446 = vmatpush1.msra.mxu0 0.0
        %447 = vmatprep.subr.mxu0 0.0
        %448 = vmatpush1.msra.mxu0 0.0
        %449 = vmatprep.subr.mxu0 0.0
        %450 = vmatpush1.msra.mxu0 0.0
        %451 = vmatprep.subr.mxu0 0.0
        %452 = vmatpush1.msra.mxu0 0.0
        %453 = vmatprep.mubr.f32.mxu0 0.0
        %454 = vmatmul.mubr.f32.gmra.mrb[0].mxu0 %v387
        %v455 = vpop.f32.mrb[0].mxu0
        %v456 = vadd.f32 %v383, %v455
        %v457 = vpop.f32.mrb[0].mxu0
        %458 = vdwg.mxu0
        %v459 = vmax.f32 %v456, 0.0
        %460 = vst.msk [vmem:[%s217] sm:$0xff] %vm373, %v459
        %s461 = sand.u32 %s137, 1
        %s462 = scalar_lea.sflag [#allocation4], %s461
        %s463 = sand.u32 %s137, 1
        %s464 = smul.addr %s463, 8
        %s465 = scalar_lea.vmem [#allocation3], %s464
        // Predicated region
        $region41: #{tpu_custom_call.1} parent=39 // pred_check
          %p466 = pneg %p147
        $region42: #{tpu_custom_call.1} parent=39 // pred_check_branch
          %468 = sbr.rel (%p466) target = $region44
        $region43: #{tpu_custom_call.1} parent=39 // pred_region
          %s470 = ssub.s32 128, 128
          %471 = vsyncadd %s462, %s470
          %s472 = smul.addr %s19, 128
          %s473 = scalar_lea.hbm %s5, %s472
          %s475 = sshll.u32 %s465, 4
          %s476 = int_to_ptr.vmem [resolvable:$true] %s475
          %478 = dma.vmem_to_hbm [thread:$0]  %s476, 128, %s473, %s462
        $region44: #{tpu_custom_call.1} parent=39 // pred_fallthru
          _
      $region40: #{tpu_custom_call.1} parent=5 // pred_fallthru
        _
      %p479 = scmp.le.s32.totalorder 2, %s14
      // Predicated region
      $region45: #{tpu_custom_call.1} parent=5 // pred_check
        %p480 = pneg %p479
      $region46: #{tpu_custom_call.1} parent=5 // pred_check_branch
        %482 = sbr.rel (%p480) target = $region48
      $region47: #{tpu_custom_call.1} parent=5 // pred_region
        %s483 = ssub.s32 %s14, 2
        // Predicated region
        $region49: #{tpu_custom_call.1} parent=47 // pred_check
          %p484 = pneg %p153
        $region50: #{tpu_custom_call.1} parent=47 // pred_check_branch
          %486 = sbr.rel (%p484) target = $region52
        $region51: #{tpu_custom_call.1} parent=47 // pred_region
          %s487 = sand.u32 %s138, 1
          %s488 = scalar_lea.sflag [#allocation4], %s487
          %s489 = sand.u32 %s138, 1
          %s490 = smul.addr %s489, 8
          %s491 = scalar_lea.vmem [#allocation3], %s490
          %492 = dma.done %s488, 128
        $region52: #{tpu_custom_call.1} parent=47 // pred_fallthru
          _
      $region48: #{tpu_custom_call.1} parent=5 // pred_fallthru
        _
    $region6: #{tpu_custom_call.1} parent=1 // loop_footer
      %s18 = sadd.s32 1, %s14
    $region7: #{tpu_custom_call.1} parent=1 // loop_footer_branch
      %13 = sbr.rel target = $region3
    $region8: #{tpu_custom_call.1} parent=1 // loop_exit
      _
    %493 = vsyncpa [#allocation4], 1
    %s494 = scalar_lea.sflag [#allocation4], 1
    %495 = vsyncpa %s494, 1

</llo_original>
